<compile_context>
chip_gen: v7x
topology: tpu7x:2x2x1
jax: 0.10.0
libtpu: 0.0.40
codegen_flags: <defaults>
</compile_context>

<pallas_src>
import numpy as np
import jax
import jax.numpy as jnp
from jax.experimental import pallas as pl
from jax.experimental.pallas import tpu as pltpu


# ----------------------------------------------------------------------------
# Parameter setup (deterministic, pure numpy) — same math as the PyTorch code.
# ----------------------------------------------------------------------------
def generate_anchors_np(base_size=16, ratios=None, scales=None):
    if ratios is None:
        ratios = np.array([0.5, 1, 2])
    if scales is None:
        scales = np.array([2 ** 0, 2 ** (1.0 / 3.0), 2 ** (2.0 / 3.0)])
    num_anchors = len(ratios) * len(scales)
    anchors = np.zeros((num_anchors, 4))
    anchors[:, 2:] = base_size * np.tile(scales, (2, len(ratios))).T
    areas = anchors[:, 2] * anchors[:, 3]
    anchors[:, 2] = np.sqrt(areas / np.repeat(ratios, len(scales)))
    anchors[:, 3] = anchors[:, 2] * np.repeat(ratios, len(scales))
    anchors[:, 0::2] -= np.tile(anchors[:, 2] * 0.5, (2, 1)).T
    anchors[:, 1::2] -= np.tile(anchors[:, 3] * 0.5, (2, 1)).T
    return anchors


def shift_np(shape, stride, anchors):
    shift_x = (np.arange(0, shape[1]) + 0.5) * stride
    shift_y = (np.arange(0, shape[0]) + 0.5) * stride
    shift_x, shift_y = np.meshgrid(shift_x, shift_y)
    shifts = np.vstack((shift_x.ravel(), shift_y.ravel(),
                        shift_x.ravel(), shift_y.ravel())).transpose()
    A = anchors.shape[0]
    K = shifts.shape[0]
    all_anchors = (anchors.reshape((1, A, 4)) +
                   shifts.reshape((1, K, 4)).transpose((1, 0, 2)))
    return all_anchors.reshape((K * A, 4))


# ----------------------------------------------------------------------------
# Per-level constants.  Output layout per level: (Hf, Wf*A*4) lane-dense rows,
#   out[y, x*A*4 + a*4 + c] = base[a, c] + (c even ? (x+0.5)*stride
#                                                  : (y+0.5)*stride)
# Row 0 of `const` folds base anchors + per-cell x shift (x coordinates);
# row 1 is a {0,1} mask selecting the y coordinates.  The per-row y shift is
# generated in-kernel from an iota (no extra input).
# ----------------------------------------------------------------------------
def _level_constants(base_anchors, feat_w, stride):
    A = base_anchors.shape[0]
    w36 = feat_w * A * 4
    x_shift = (np.arange(feat_w, dtype=np.float64) + 0.5) * float(stride)     # (Wf,)
    x_coord = np.array([1.0, 0.0, 1.0, 0.0])                                  # (x1,y1,x2,y2)
    row_base = (base_anchors.reshape(1, A, 4) +
                x_shift[:, None, None] * x_coord[None, None, :])               # (Wf, A, 4)
    y_mask = np.broadcast_to(1.0 - x_coord, (feat_w, A, 4))
    const = np.stack([row_base.reshape(w36), y_mask.reshape(w36)], axis=0)
    return const.astype(np.float32)                                            # (2, w36)


# ----------------------------------------------------------------------------
# Tiling policy.
# ----------------------------------------------------------------------------
def _device_generation():
    try:
        kind = jax.devices()[0].device_kind.lower()
    except Exception:
        return 0
    for gen in (7, 6, 5, 4):
        if "v%d" % gen in kind:
            return gen
    return 0


def _target_block_bytes():
    # v6e / v7x: fast HBM -> amortize the ~0.35us/step pipeline overhead with
    # ~8 MiB output blocks.  v5e / unknown: stay at 4 MiB (double-buffered
    # output fits the 16 MiB scoped default with room to spare).
    return (8 << 20) if _device_generation() >= 6 else (4 << 20)


def _choose_tile_rows(feat_h, w36, target_bytes):
    row_bytes = w36 * 4
    th = max(8, (target_bytes // row_bytes) // 8 * 8)        # multiple-of-8 rows
    if feat_h >= 16:
        # Keep >= 2 grid steps so dimension_semantics=("parallel",) actually
        # shards rows across both TensorCores on v7x (and overlaps writeback
        # with compute on single-TC chips).
        half_up = (((feat_h + 1) // 2) + 7) // 8 * 8
        th = min(th, half_up)
    if th >= feat_h:
        return feat_h                                        # single full block
    return th


# ----------------------------------------------------------------------------
# Pallas kernel: one broadcasted FMA per output block, y shift from iota.
# ----------------------------------------------------------------------------
def _make_row_kernel(stride):
    stride_f = float(stride)

    def kernel(const_ref, out_ref):
        # const_ref : (2, W36)  row 0 = base anchors + per-cell x shift
        #                       row 1 = 1.0 on y coords, 0.0 on x coords
        # out_ref   : (TH, W36) lane-dense output rows
        th = out_ref.shape[0]
        row0 = pl.program_id(0) * th
        y_idx = jax.lax.broadcasted_iota(jnp.int32, (th, 1), 0) + row0
        y_shift = (y_idx.astype(jnp.float32) + jnp.float32(0.5)) * jnp.float32(stride_f)
        out_ref[...] = const_ref[0:1, :] + const_ref[1:2, :] * y_shift

    return kernel


def _shifted_anchors_level_pallas(base_anchors_np, feat_h, feat_w, stride):
    A = int(base_anchors_np.shape[0])
    Hf, Wf = int(feat_h), int(feat_w)
    w36 = Wf * A * 4

    const = jnp.asarray(_level_constants(base_anchors_np, Wf, stride))

    th = _choose_tile_rows(Hf, w36, _target_block_bytes())
    grid = (pl.cdiv(Hf, th),)
    block_bytes = th * w36 * 4
    # Double-buffered output + small const block, with headroom; safely below
    # physical VMEM on v5e/v6e (128 MiB) and v7x (64 MiB).
    vmem_limit = int(min(48 << 20, max(16 << 20, 2 * block_bytes + (2 << 20))))

    out = pl.pallas_call(
        _make_row_kernel(stride),
        out_shape=jax.ShapeDtypeStruct((Hf, w36), jnp.float32),
        grid=grid,
        in_specs=[pl.BlockSpec((2, w36), lambda i: (0, 0))],
        out_specs=pl.BlockSpec((th, w36), lambda i: (i, 0)),
        compiler_params=pltpu.CompilerParams(
            dimension_semantics=("parallel",),
            vmem_limit_bytes=vmem_limit),
        cost_estimate=pl.CostEstimate(
            flops=2 * Hf * w36,
            transcendentals=0,
            bytes_accessed=(Hf * w36 + 2 * w36) * 4),
    )(const)

    # Row-major reshape (y, x, a, c) -> (K*A, 4); matches the reference layout.
    return out.reshape(Hf * Wf * A, 4)


def _shifted_anchors_level_jnp(base_anchors_np, feat_h, feat_w, stride):
    # Tiny level: launch overhead would dominate and w36 may be < 128 lanes,
    # so just emit the broadcast in jnp (XLA fuses it into the concatenate).
    A = int(base_anchors_np.shape[0])
    Hf, Wf = int(feat_h), int(feat_w)
    const = _level_constants(base_anchors_np, Wf, stride)
    row_base = jnp.asarray(const[0])[None, :]
    y_mask = jnp.asarray(const[1])[None, :]
    y_shift = jnp.asarray(
        ((np.arange(Hf, dtype=np.float64) + 0.5) * float(stride))
        .astype(np.float32))[:, None]
    out = row_base + y_mask * y_shift
    return out.reshape(Hf * Wf * A, 4)


_MIN_PALLAS_BYTES = 512 * 1024   # below this the fixed launch cost dominates
_MIN_LANE_WIDTH = 128            # narrower rows would hit masked stores


def shifted_anchors_level(base_anchors_np, feat_h, feat_w, stride):
    A = int(base_anchors_np.shape[0])
    w36 = int(feat_w) * A * 4
    level_bytes = int(feat_h) * w36 * 4
    if w36 >= _MIN_LANE_WIDTH and level_bytes >= _MIN_PALLAS_BYTES:
        return _shifted_anchors_level_pallas(base_anchors_np, feat_h, feat_w, stride)
    return _shifted_anchors_level_jnp(base_anchors_np, feat_h, feat_w, stride)


# ----------------------------------------------------------------------------
# Module wrapper mirroring torch.nn.Module Anchors.forward.
# ----------------------------------------------------------------------------
class AnchorsPallas:
    def __init__(self, pyramid_levels=None, strides=None, sizes=None,
                 ratios=None, scales=None):
        self.pyramid_levels = [2, 3, 4, 5, 6] if pyramid_levels is None else pyramid_levels
        self.strides = [2 ** x for x in self.pyramid_levels] if strides is None else strides
        self.sizes = [2 ** (x + 2) for x in self.pyramid_levels] if sizes is None else sizes
        self.ratios = np.array([0.5, 1, 2]) if ratios is None else ratios
        self.scales = (np.array([2 ** 0, 2 ** (1.0 / 3.0), 2 ** (2.0 / 3.0)])
                       if scales is None else scales)

    def __call__(self, image):
        # layout: image is NCHW — only the spatial dims (H, W) are consumed.
        image_shape = np.array(image.shape[2:])
        image_shapes = [(image_shape + 2 ** x - 1) // (2 ** x)
                        for x in self.pyramid_levels]
        per_level = []
        for idx, _ in enumerate(self.pyramid_levels):
            anchors = generate_anchors_np(base_size=self.sizes[idx],
                                          ratios=self.ratios,
                                          scales=self.scales)
            per_level.append(
                shifted_anchors_level(anchors,
                                      image_shapes[idx][0],
                                      image_shapes[idx][1],
                                      self.strides[idx]))
        all_anchors = jnp.concatenate(per_level, axis=0)
        return all_anchors[None, :, :].astype(jnp.float32)  # (1, total, 4)


# ----------------------------------------------------------------------------
# Reference (pure numpy, same as the PyTorch module) for the self-check.
# ----------------------------------------------------------------------------
def _reference_numpy(image_shape_hw, module):
    image_shape = np.array(image_shape_hw)
    image_shapes = [(image_shape + 2 ** x - 1) // (2 ** x)
                    for x in module.pyramid_levels]
    all_anchors = np.zeros((0, 4)).astype(np.float32)
    for idx, _ in enumerate(module.pyramid_levels):
        anchors = generate_anchors_np(base_size=module.sizes[idx],
                                      ratios=module.ratios,
                                      scales=module.scales)
        shifted = shift_np(image_shapes[idx], module.strides[idx], anchors)
        all_anchors = np.append(all_anchors, shifted, axis=0)
    return np.expand_dims(all_anchors, axis=0).astype(np.float32)


if __name__ == "__main__":
    key = jax.random.PRNGKey(0)
    # NCHW, consistent with the PyTorch module's expectation.  256x256 spatial
    # so the largest pyramid level takes the Pallas path (multi-block grid)
    # while the small levels exercise the jnp fallback.
    image = jax.random.normal(key, (2, 4, 256, 256), dtype=jnp.float32)

    module = AnchorsPallas()
    out = jax.block_until_ready(module(image))

    ref = _reference_numpy(image.shape[2:], module)
    assert out.shape == ref.shape, (out.shape, ref.shape)
    np.testing.assert_allclose(np.asarray(out), ref, rtol=1e-5, atol=1e-3)

    print("KERNEL_OK")
</pallas_src>

<mosaic_0001>
module attributes {stable_mosaic.version = 11 : i64} {
  func.func @kernel(%arg0: i32, %arg1: memref<2x2304xf32, #tpu.memory_space<vmem>>, %arg2: memref<32x2304xf32, #tpu.memory_space<vmem>>) attributes {dimension_semantics = [#tpu.dimension_semantics<parallel>], iteration_bounds = array<i64: 2>, scalar_prefetch = 0 : i64, scratch_operands = 0 : i64, tpu.core_type = #tpu.core_type<tc>, window_params = [{pipeline_mode = #tpu.pipeline_mode<synchronous>, transform_indices = @transform_0, window_bounds = array<i64: 2, 2304>}, {transform_indices = @transform_1, window_bounds = array<i64: 32, 2304>}]} {
    %c32_i32 = arith.constant 32 : i32
    %0 = arith.muli %arg0, %c32_i32 : i32
    %1 = tpu.iota {dimensions = array<i32: 0>} : vector<32x1xi32>
    %2 = vector.broadcast %0 : i32 to vector<32x1xi32>
    %3 = arith.addi %1, %2 : vector<32x1xi32>
    %4 = arith.sitofp %3 : vector<32x1xi32> to vector<32x1xf32>
    %cst = arith.constant 5.000000e-01 : f32
    %5 = vector.broadcast %cst : f32 to vector<32x1xf32>
    %6 = arith.addf %4, %5 : vector<32x1xf32>
    %cst_0 = arith.constant 4.000000e+00 : f32
    %7 = vector.broadcast %cst_0 : f32 to vector<32x1xf32>
    %8 = arith.mulf %6, %7 : vector<32x1xf32>
    %c0 = arith.constant 0 : index
    %c0_1 = arith.constant 0 : index
    %9 = vector.load %arg1[%c0, %c0_1] : memref<2x2304xf32, #tpu.memory_space<vmem>>, vector<1x2304xf32>
    %c1 = arith.constant 1 : index
    %c0_2 = arith.constant 0 : index
    %10 = vector.load %arg1[%c1, %c0_2] : memref<2x2304xf32, #tpu.memory_space<vmem>>, vector<1x2304xf32>
    %11 = vector.broadcast %10 : vector<1x2304xf32> to vector<32x2304xf32>
    %12 = vector.broadcast %8 : vector<32x1xf32> to vector<32x2304xf32>
    %13 = arith.mulf %11, %12 : vector<32x2304xf32>
    %14 = vector.broadcast %9 : vector<1x2304xf32> to vector<32x2304xf32>
    %15 = arith.addf %14, %13 : vector<32x2304xf32>
    %c0_3 = arith.constant 0 : index
    %c0_4 = arith.constant 0 : index
    %16 = vector.load %arg2[%c0_3, %c0_4] : memref<32x2304xf32, #tpu.memory_space<vmem>>, vector<32x2304xf32>
    tpu.vector_store %arg2[%c0_3, %c0_4], %15 {strides = array<i32>} : memref<32x2304xf32, #tpu.memory_space<vmem>>, vector<32x2304xf32>,
    return
  }
  func.func @transform_0(%arg0: i32) -> (i32, i32) {
    %c0_i32 = arith.constant 0 : i32
    %c0_i32_0 = arith.constant 0 : i32
    %c0_i32_1 = arith.constant 0 : i32
    return %c0_i32, %c0_i32_0 : i32, i32
  }
  func.func @transform_1(%arg0: i32) -> (i32, i32) {
    %c0_i32 = arith.constant 0 : i32
    %c0_i32_0 = arith.constant 0 : i32
    return %arg0, %c0_i32 : i32, i32
  }
}

</mosaic_0001>

<llo_original>
// kernel: tpu_custom_call.1
$region0: #{tpu_custom_call.1}
  #allocation0 [shape = 'u32[]', space=smem, size = 0x4, offset = 0x4, fixed_abs, tag = 'smem constant byte address 0x4 - core index']
  #allocation1 [shape = 'u32[144,128]{1,0:T(1,128)}', space=vmem, size = 0x12000, scoped, tag = 'internal scratch']
  %s0 = inlined_call_operand.hbm [shape: f32[2,2304], index: 0, kind: input, shape index: {}]
  %s1 = inlined_call_operand.hbm [shape: f32[64,2304], index: 1, kind: output, shape index: {}]
  %s2 = sld [smem:[#allocation0]]
  $region41: #{tpu_custom_call.1} parent=0
    _
  %s4 = ssub.s32 1, %s2
  %s5 = scalar_select 0, %s4, %s2
  $region1: #{tpu_custom_call.1} parent=0
    #allocation2 [shape = 'u8[18432]{0}', space=vmem, size = 0x4800, scoped, tag = 'input window, operand 0, single buffered']
    #allocation3 [shape = 's32[2]{0}', space=sflag, size = 0x8, scoped, tag = 'scoped memory for tpu_custom_call.1']
    #allocation4 [shape = 's32[2]{0}', space=sflag, size = 0x8, scoped, tag = 'scoped memory for tpu_custom_call.1']
    #allocation5 [shape = 'u8[589824]{0}', space=vmem, size = 0x90000, scoped, tag = 'output window, operand 0']
    %6 = vsyncpa [#allocation3], 0
    %7 = vsyncpa [#allocation4], 0
    %s8 = scalar_lea.sflag [#allocation4], 1
    %9 = vsyncpa %s8, 0
    loop: start=0, step=1, limit=4
    $region2: #{tpu_custom_call.1} parent=1 // loop_pre_header
      _
    $region3: #{tpu_custom_call.1} parent=1 // loop_header
      %s11 = sphi 0, %s15
      %p12 = scmp.ge.s32.totalorder %s11, 4
      %s19 = sphi 0, %s19
      %s21 = sphi 0, %s19
      %s22 = sphi 0, %s21
      %s36 = sphi 0, %s22
      %s42 = sphi 0, %s44
      %s45 = sphi 0, %s42
      %s46 = sphi 0, %s45
      %s62 = sphi 0, %s46
    $region4: #{tpu_custom_call.1} parent=1 // loop_header_branch
      %14 = sbr.rel (%p12) target = $region8
    $region5: #{tpu_custom_call.1} parent=1 // loop_body
      %s16 = ssub.s32 %s11, 1
      %s17 = ssub.s32 %s11, 2
      %s18 = sadd.s32 %s11, 1
      %s20 = sadd.s32 %s19, 1
      %p23 = scmp.eq.s32.totalorder %s11, 1
      %p24 = scmp.ne.s32.totalorder %s19, %s21
      %p25 = scmp.eq.s32.totalorder %s11, 0
      %p26 = por %p24, %p25
      %p27 = scmp.ne.s32.totalorder %s19, %s21
      %p28 = scmp.eq.s32.totalorder %s16, 1
      %p29 = por %p27, %p28
      %p30 = scmp.ne.s32.totalorder %s21, %s22
      %p31 = scmp.eq.s32.totalorder %s16, 0
      %p32 = por %p30, %p31
      %p33 = scmp.ne.s32.totalorder %s21, %s22
      %p34 = scmp.eq.s32.totalorder %s17, 1
      %p35 = por %p33, %p34
      %p37 = scmp.ne.s32.totalorder %s22, %s36
      %p38 = scmp.eq.s32.totalorder %s17, 0
      %p39 = por %p37, %p38
      %s40 = ssub.s32 %s11, %s18
      %p41 = scmp.eq.s32.totalorder %s40, 0
      %s43 = sadd.s32 %s42, 1
      %s44 = scalar_select %p41, %s42, %s43
      %p47 = pneg %p41
      %p48 = scmp.eq.s32.totalorder %s11, 1
      %p49 = por %p47, %p48
      %p50 = scmp.ne.s32.totalorder %s42, %s45
      %p51 = scmp.eq.s32.totalorder %s11, 0
      %p52 = por %p50, %p51
      %p53 = scmp.ne.s32.totalorder %s42, %s45
      %p54 = scmp.eq.s32.totalorder %s16, 1
      %p55 = por %p53, %p54
      %p56 = scmp.ne.s32.totalorder %s45, %s46
      %p57 = scmp.eq.s32.totalorder %s16, 0
      %p58 = por %p56, %p57
      %p59 = scmp.ne.s32.totalorder %s45, %s46
      %p60 = scmp.eq.s32.totalorder %s17, 1
      %p61 = por %p59, %p60
      %p63 = scmp.ne.s32.totalorder %s46, %s62
      %p64 = scmp.eq.s32.totalorder %s17, 0
      %p65 = por %p63, %p64
      %p66 = scmp.le.s32.totalorder 1, %s11
      %p67 = scmp.lt.s32.totalorder %s11, 3
      %p68 = pnand %p66, %p67
      %p69 = pneg %p68
      // Predicated region
      $region9: #{tpu_custom_call.1} parent=5 // pred_check
        _
      $region10: #{tpu_custom_call.1} parent=5 // pred_check_branch
        %71 = sbr.rel (%p68) target = $region12
      $region11: #{tpu_custom_call.1} parent=5 // pred_region
        %s72 = ssub.s32 %s11, 1
        // Predicated region
        $region13: #{tpu_custom_call.1} parent=11 // pred_check
          %p73 = pneg %p32
        $region14: #{tpu_custom_call.1} parent=11 // pred_check_branch
          %75 = sbr.rel (%p73) target = $region16
        $region15: #{tpu_custom_call.1} parent=11 // pred_region
          %s77 = ssub.s32 576, 576
          %78 = vsyncadd [#allocation3], %s77
          %s80 = sshll.u32 [#allocation2], 4
          %s81 = int_to_ptr.vmem [resolvable:$true] %s80
          %83 = dma.hbm_to_vmem [thread:$0]  %s0, 576, %s81, [#allocation3]
        $region16: #{tpu_custom_call.1} parent=11 // pred_fallthru
          _
      $region12: #{tpu_custom_call.1} parent=5 // pred_fallthru
        _
      %p84 = scmp.lt.s32.totalorder %s11, 2
      // Predicated region
      $region17: #{tpu_custom_call.1} parent=5 // pred_check
        %p85 = pneg %p84
      $region18: #{tpu_custom_call.1} parent=5 // pred_check_branch
        %87 = sbr.rel (%p85) target = $region20
      $region19: #{tpu_custom_call.1} parent=5 // pred_region
        _
      $region20: #{tpu_custom_call.1} parent=5 // pred_fallthru
        _
      %p88 = scmp.le.s32.totalorder 1, %s11
      %p89 = scmp.lt.s32.totalorder %s11, 3
      %p90 = pnand %p88, %p89
      %p91 = pneg %p90
      // Predicated region
      $region21: #{tpu_custom_call.1} parent=5 // pred_check
        _
      $region22: #{tpu_custom_call.1} parent=5 // pred_check_branch
        %93 = sbr.rel (%p90) target = $region24
      $region23: #{tpu_custom_call.1} parent=5 // pred_region
        %s94 = ssub.s32 %s11, 1
        // Predicated region
        $region25: #{tpu_custom_call.1} parent=23 // pred_check
          %p95 = pneg %p32
        $region26: #{tpu_custom_call.1} parent=23 // pred_check_branch
          %97 = sbr.rel (%p95) target = $region28
        $region27: #{tpu_custom_call.1} parent=23 // pred_region
          %98 = dma.done [#allocation3], 576
        $region28: #{tpu_custom_call.1} parent=23 // pred_fallthru
          _
        %p99 = pneg %p32
        %p100 = pneg %p29
        %p101 = pneg %p58
        %p102 = pneg %p55
        %s103 = sand.u32 %s45, 1
        %s104 = scalar_lea.sflag [#allocation4], %s103
        %s105 = sand.u32 %s45, 1
        %s106 = smul.addr %s105, 576
        %s107 = scalar_lea.vmem [#allocation5], %s106
        %s108 = smul.u32 4, %s16
        %s109 = smul.u32 %s16, 32
        %v110 = vlaneseq
        %v111 = vshrl.u32 %v110, 7
        %v112 = vadd.s32 %v111, 8
        %v113 = vadd.s32 %v111, 16
        %v114 = vadd.s32 %v111, 24
        %v115 = vstv %s109
        %v116 = vadd.s32 %v111, %v115
        %v117 = vadd.s32 %v112, %v115
        %v118 = vadd.s32 %v113, %v115
        %v119 = vadd.s32 %v114, %v115
        %v120 = vcvt.s32.f32 %v116
        %v121 = vcvt.s32.f32 %v117
        %v122 = vcvt.s32.f32 %v118
        %v123 = vcvt.s32.f32 %v119
        %v124 = vadd.f32 %v120, 0.5
        %v125 = vadd.f32 %v121, 0.5
        %v126 = vadd.f32 %v122, 0.5
        %v127 = vadd.f32 %v123, 0.5
        %v128 = vmul.f32 %v124, 4.0
        %v129 = vmul.f32 %v125, 4.0
        %v130 = vmul.f32 %v126, 4.0
        %v131 = vmul.f32 %v127, 4.0
        %v132 = vld [vmem:[#allocation2] ss:$2 sm:$0xff]
        %s133 = scalar_lea.vmem [#allocation2], 16
        %v134 = vld [vmem:[%s133] ss:$2 sm:$0xff]
        %s135 = scalar_lea.vmem [#allocation2], 32
        %v136 = vld [vmem:[%s135] ss:$2 sm:$0x3]
        %s137 = scalar_lea.vmem [#allocation2], 1
        %v138 = vld [vmem:[%s137] ss:$2 sm:$0xff]
        %s139 = scalar_lea.vmem [#allocation2], 17
        %v140 = vld [vmem:[%s139] ss:$2 sm:$0xff]
        %s141 = scalar_lea.vmem [#allocation2], 33
        %v142 = vld [vmem:[%s141] ss:$2 sm:$0x3]
        %v146 = vlaneseq
        %v147 = vshrl.u32 %v146, 7
        %v148 = vsub.s32 0, %v147
        %v149 = vrot.slane %v138, %v148
        %v150 = vlaneseq
        %v151 = vshrl.u32 %v150, 7
        %v152 = vsub.s32 1, %v151
        %v153 = vrot.slane %v138, %v152
        %v154 = vlaneseq
        %v155 = vshrl.u32 %v154, 7
        %v156 = vsub.s32 2, %v155
        %v157 = vrot.slane %v138, %v156
        %v158 = vlaneseq
        %v159 = vshrl.u32 %v158, 7
        %v160 = vsub.s32 3, %v159
        %v161 = vrot.slane %v138, %v160
        %v162 = vlaneseq
        %v163 = vshrl.u32 %v162, 7
        %v164 = vsub.s32 4, %v163
        %v165 = vrot.slane %v138, %v164
        %v166 = vlaneseq
        %v167 = vshrl.u32 %v166, 7
        %v168 = vsub.s32 5, %v167
        %v169 = vrot.slane %v138, %v168
        %v170 = vlaneseq
        %v171 = vshrl.u32 %v170, 7
        %v172 = vsub.s32 6, %v171
        %v173 = vrot.slane %v138, %v172
        %v174 = vlaneseq
        %v175 = vshrl.u32 %v174, 7
        %v176 = vsub.s32 7, %v175
        %v177 = vrot.slane %v138, %v176
        %v178 = vlaneseq
        %v179 = vshrl.u32 %v178, 7
        %v180 = vsub.s32 0, %v179
        %v181 = vrot.slane %v140, %v180
        %v182 = vlaneseq
        %v183 = vshrl.u32 %v182, 7
        %v184 = vsub.s32 1, %v183
        %v185 = vrot.slane %v140, %v184
        %v186 = vlaneseq
        %v187 = vshrl.u32 %v186, 7
        %v188 = vsub.s32 2, %v187
        %v189 = vrot.slane %v140, %v188
        %v190 = vlaneseq
        %v191 = vshrl.u32 %v190, 7
        %v192 = vsub.s32 3, %v191
        %v193 = vrot.slane %v140, %v192
        %v194 = vlaneseq
        %v195 = vshrl.u32 %v194, 7
        %v196 = vsub.s32 4, %v195
        %v197 = vrot.slane %v140, %v196
        %v198 = vlaneseq
        %v199 = vshrl.u32 %v198, 7
        %v200 = vsub.s32 5, %v199
        %v201 = vrot.slane %v140, %v200
        %v202 = vlaneseq
        %v203 = vshrl.u32 %v202, 7
        %v204 = vsub.s32 6, %v203
        %v205 = vrot.slane %v140, %v204
        %v206 = vlaneseq
        %v207 = vshrl.u32 %v206, 7
        %v208 = vsub.s32 7, %v207
        %v209 = vrot.slane %v140, %v208
        %v210 = vlaneseq
        %v211 = vshrl.u32 %v210, 7
        %v212 = vsub.s32 0, %v211
        %v213 = vrot.slane %v142, %v212
        %v214 = vlaneseq
        %v215 = vshrl.u32 %v214, 7
        %v216 = vsub.s32 1, %v215
        %v217 = vrot.slane %v142, %v216
        %v236 = vmul.f32 %v149, %v128
        %v237 = vmul.f32 %v153, %v128
        %v238 = vmul.f32 %v157, %v128
        %v239 = vmul.f32 %v161, %v128
        %v240 = vmul.f32 %v165, %v128
        %v241 = vmul.f32 %v169, %v128
        %v242 = vmul.f32 %v173, %v128
        %v243 = vmul.f32 %v177, %v128
        %v244 = vmul.f32 %v181, %v128
        %v245 = vmul.f32 %v185, %v128
        %v246 = vmul.f32 %v189, %v128
        %v247 = vmul.f32 %v193, %v128
        %v248 = vmul.f32 %v197, %v128
        %v249 = vmul.f32 %v201, %v128
        %v250 = vmul.f32 %v205, %v128
        %v251 = vmul.f32 %v209, %v128
        %v252 = vmul.f32 %v213, %v128
        %v253 = vmul.f32 %v217, %v128
        %v254 = vmul.f32 %v149, %v129
        %v255 = vmul.f32 %v153, %v129
        %v256 = vmul.f32 %v157, %v129
        %v257 = vmul.f32 %v161, %v129
        %v258 = vmul.f32 %v165, %v129
        %v259 = vmul.f32 %v169, %v129
        %v260 = vmul.f32 %v173, %v129
        %v261 = vmul.f32 %v177, %v129
        %v262 = vmul.f32 %v181, %v129
        %v263 = vmul.f32 %v185, %v129
        %v264 = vmul.f32 %v189, %v129
        %v265 = vmul.f32 %v193, %v129
        %v266 = vmul.f32 %v197, %v129
        %v267 = vmul.f32 %v201, %v129
        %v268 = vmul.f32 %v205, %v129
        %v269 = vmul.f32 %v209, %v129
        %v270 = vmul.f32 %v213, %v129
        %v271 = vmul.f32 %v217, %v129
        %v272 = vmul.f32 %v149, %v130
        %v273 = vmul.f32 %v153, %v130
        %v274 = vmul.f32 %v157, %v130
        %v275 = vmul.f32 %v161, %v130
        %v276 = vmul.f32 %v165, %v130
        %v277 = vmul.f32 %v169, %v130
        %v278 = vmul.f32 %v173, %v130
        %v279 = vmul.f32 %v177, %v130
        %v280 = vmul.f32 %v181, %v130
        %v281 = vmul.f32 %v185, %v130
        %v282 = vmul.f32 %v189, %v130
        %v283 = vmul.f32 %v193, %v130
        %v284 = vmul.f32 %v197, %v130
        %v285 = vmul.f32 %v201, %v130
        %v286 = vmul.f32 %v205, %v130
        %v287 = vmul.f32 %v209, %v130
        %v288 = vmul.f32 %v213, %v130
        %v289 = vmul.f32 %v217, %v130
        %v290 = vmul.f32 %v149, %v131
        %v291 = vmul.f32 %v153, %v131
        %v292 = vmul.f32 %v157, %v131
        %v293 = vmul.f32 %v161, %v131
        %v294 = vmul.f32 %v165, %v131
        %v295 = vmul.f32 %v169, %v131
        %v296 = vmul.f32 %v173, %v131
        %v297 = vmul.f32 %v177, %v131
        %v298 = vmul.f32 %v181, %v131
        %v299 = vmul.f32 %v185, %v131
        %v300 = vmul.f32 %v189, %v131
        %v301 = vmul.f32 %v193, %v131
        %v302 = vmul.f32 %v197, %v131
        %v303 = vmul.f32 %v201, %v131
        %v304 = vmul.f32 %v205, %v131
        %v305 = vmul.f32 %v209, %v131
        %v306 = vmul.f32 %v213, %v131
        %v307 = vmul.f32 %v217, %v131
        %v311 = vlaneseq
        %v312 = vshrl.u32 %v311, 7
        %v313 = vsub.s32 0, %v312
        %v314 = vrot.slane %v132, %v313
        %v315 = vlaneseq
        %v316 = vshrl.u32 %v315, 7
        %v317 = vsub.s32 1, %v316
        %v318 = vrot.slane %v132, %v317
        %v319 = vlaneseq
        %v320 = vshrl.u32 %v319, 7
        %v321 = vsub.s32 2, %v320
        %v322 = vrot.slane %v132, %v321
        %v323 = vlaneseq
        %v324 = vshrl.u32 %v323, 7
        %v325 = vsub.s32 3, %v324
        %v326 = vrot.slane %v132, %v325
        %v327 = vlaneseq
        %v328 = vshrl.u32 %v327, 7
        %v329 = vsub.s32 4, %v328
        %v330 = vrot.slane %v132, %v329
        %v331 = vlaneseq
        %v332 = vshrl.u32 %v331, 7
        %v333 = vsub.s32 5, %v332
        %v334 = vrot.slane %v132, %v333
        %v335 = vlaneseq
        %v336 = vshrl.u32 %v335, 7
        %v337 = vsub.s32 6, %v336
        %v338 = vrot.slane %v132, %v337
        %v339 = vlaneseq
        %v340 = vshrl.u32 %v339, 7
        %v341 = vsub.s32 7, %v340
        %v342 = vrot.slane %v132, %v341
        %v343 = vlaneseq
        %v344 = vshrl.u32 %v343, 7
        %v345 = vsub.s32 0, %v344
        %v346 = vrot.slane %v134, %v345
        %v347 = vlaneseq
        %v348 = vshrl.u32 %v347, 7
        %v349 = vsub.s32 1, %v348
        %v350 = vrot.slane %v134, %v349
        %v351 = vlaneseq
        %v352 = vshrl.u32 %v351, 7
        %v353 = vsub.s32 2, %v352
        %v354 = vrot.slane %v134, %v353
        %v355 = vlaneseq
        %v356 = vshrl.u32 %v355, 7
        %v357 = vsub.s32 3, %v356
        %v358 = vrot.slane %v134, %v357
        %v359 = vlaneseq
        %v360 = vshrl.u32 %v359, 7
        %v361 = vsub.s32 4, %v360
        %v362 = vrot.slane %v134, %v361
        %v363 = vlaneseq
        %v364 = vshrl.u32 %v363, 7
        %v365 = vsub.s32 5, %v364
        %v366 = vrot.slane %v134, %v365
        %v367 = vlaneseq
        %v368 = vshrl.u32 %v367, 7
        %v369 = vsub.s32 6, %v368
        %v370 = vrot.slane %v134, %v369
        %v371 = vlaneseq
        %v372 = vshrl.u32 %v371, 7
        %v373 = vsub.s32 7, %v372
        %v374 = vrot.slane %v134, %v373
        %v375 = vlaneseq
        %v376 = vshrl.u32 %v375, 7
        %v377 = vsub.s32 0, %v376
        %v378 = vrot.slane %v136, %v377
        %v379 = vlaneseq
        %v380 = vshrl.u32 %v379, 7
        %v381 = vsub.s32 1, %v380
        %v382 = vrot.slane %v136, %v381
        %v401 = vadd.f32 %v314, %v236
        %v402 = vadd.f32 %v318, %v237
        %v403 = vadd.f32 %v322, %v238
        %v404 = vadd.f32 %v326, %v239
        %v405 = vadd.f32 %v330, %v240
        %v406 = vadd.f32 %v334, %v241
        %v407 = vadd.f32 %v338, %v242
        %v408 = vadd.f32 %v342, %v243
        %v409 = vadd.f32 %v346, %v244
        %v410 = vadd.f32 %v350, %v245
        %v411 = vadd.f32 %v354, %v246
        %v412 = vadd.f32 %v358, %v247
        %v413 = vadd.f32 %v362, %v248
        %v414 = vadd.f32 %v366, %v249
        %v415 = vadd.f32 %v370, %v250
        %v416 = vadd.f32 %v374, %v251
        %v417 = vadd.f32 %v378, %v252
        %v418 = vadd.f32 %v382, %v253
        %v419 = vadd.f32 %v314, %v254
        %v420 = vadd.f32 %v318, %v255
        %v421 = vadd.f32 %v322, %v256
        %v422 = vadd.f32 %v326, %v257
        %v423 = vadd.f32 %v330, %v258
        %v424 = vadd.f32 %v334, %v259
        %v425 = vadd.f32 %v338, %v260
        %v426 = vadd.f32 %v342, %v261
        %v427 = vadd.f32 %v346, %v262
        %v428 = vadd.f32 %v350, %v263
        %v429 = vadd.f32 %v354, %v264
        %v430 = vadd.f32 %v358, %v265
        %v431 = vadd.f32 %v362, %v266
        %v432 = vadd.f32 %v366, %v267
        %v433 = vadd.f32 %v370, %v268
        %v434 = vadd.f32 %v374, %v269
        %v435 = vadd.f32 %v378, %v270
        %v436 = vadd.f32 %v382, %v271
        %v437 = vadd.f32 %v314, %v272
        %v438 = vadd.f32 %v318, %v273
        %v439 = vadd.f32 %v322, %v274
        %v440 = vadd.f32 %v326, %v275
        %v441 = vadd.f32 %v330, %v276
        %v442 = vadd.f32 %v334, %v277
        %v443 = vadd.f32 %v338, %v278
        %v444 = vadd.f32 %v342, %v279
        %v445 = vadd.f32 %v346, %v280
        %v446 = vadd.f32 %v350, %v281
        %v447 = vadd.f32 %v354, %v282
        %v448 = vadd.f32 %v358, %v283
        %v449 = vadd.f32 %v362, %v284
        %v450 = vadd.f32 %v366, %v285
        %v451 = vadd.f32 %v370, %v286
        %v452 = vadd.f32 %v374, %v287
        %v453 = vadd.f32 %v378, %v288
        %v454 = vadd.f32 %v382, %v289
        %v455 = vadd.f32 %v314, %v290
        %v456 = vadd.f32 %v318, %v291
        %v457 = vadd.f32 %v322, %v292
        %v458 = vadd.f32 %v326, %v293
        %v459 = vadd.f32 %v330, %v294
        %v460 = vadd.f32 %v334, %v295
        %v461 = vadd.f32 %v338, %v296
        %v462 = vadd.f32 %v342, %v297
        %v463 = vadd.f32 %v346, %v298
        %v464 = vadd.f32 %v350, %v299
        %v465 = vadd.f32 %v354, %v300
        %v466 = vadd.f32 %v358, %v301
        %v467 = vadd.f32 %v362, %v302
        %v468 = vadd.f32 %v366, %v303
        %v469 = vadd.f32 %v370, %v304
        %v470 = vadd.f32 %v374, %v305
        %v471 = vadd.f32 %v378, %v306
        %v472 = vadd.f32 %v382, %v307
        %473 = vst [vmem:[%s107] sm:$0xff] %v401
        %474 = vst [vmem:[%s107 + $0x8] sm:$0xff] %v402
        %475 = vst [vmem:[%s107 + $0x10] sm:$0xff] %v403
        %476 = vst [vmem:[%s107 + $0x18] sm:$0xff] %v404
        %477 = vst [vmem:[%s107 + $0x20] sm:$0xff] %v405
        %478 = vst [vmem:[%s107 + $0x28] sm:$0xff] %v406
        %479 = vst [vmem:[%s107 + $0x30] sm:$0xff] %v407
        %480 = vst [vmem:[%s107 + $0x38] sm:$0xff] %v408
        %481 = vst [vmem:[%s107 + $0x40] sm:$0xff] %v409
        %482 = vst [vmem:[%s107 + $0x48] sm:$0xff] %v410
        %483 = vst [vmem:[%s107 + $0x50] sm:$0xff] %v411
        %484 = vst [vmem:[%s107 + $0x58] sm:$0xff] %v412
        %485 = vst [vmem:[%s107 + $0x60] sm:$0xff] %v413
        %486 = vst [vmem:[%s107 + $0x68] sm:$0xff] %v414
        %487 = vst [vmem:[%s107 + $0x70] sm:$0xff] %v415
        %488 = vst [vmem:[%s107 + $0x78] sm:$0xff] %v416
        %489 = vst [vmem:[%s107 + $0x80] sm:$0xff] %v417
        %490 = vst [vmem:[%s107 + $0x88] sm:$0xff] %v418
        %491 = vst [vmem:[%s107 + $0x90] sm:$0xff] %v419
        %492 = vst [vmem:[%s107 + $0x98] sm:$0xff] %v420
        %493 = vst [vmem:[%s107 + $0xa0] sm:$0xff] %v421
        %494 = vst [vmem:[%s107 + $0xa8] sm:$0xff] %v422
        %495 = vst [vmem:[%s107 + $0xb0] sm:$0xff] %v423
        %496 = vst [vmem:[%s107 + $0xb8] sm:$0xff] %v424
        %497 = vst [vmem:[%s107 + $0xc0] sm:$0xff] %v425
        %498 = vst [vmem:[%s107 + $0xc8] sm:$0xff] %v426
        %499 = vst [vmem:[%s107 + $0xd0] sm:$0xff] %v427
        %500 = vst [vmem:[%s107 + $0xd8] sm:$0xff] %v428
        %501 = vst [vmem:[%s107 + $0xe0] sm:$0xff] %v429
        %502 = vst [vmem:[%s107 + $0xe8] sm:$0xff] %v430
        %503 = vst [vmem:[%s107 + $0xf0] sm:$0xff] %v431
        %504 = vst [vmem:[%s107 + $0xf8] sm:$0xff] %v432
        %505 = vst [vmem:[%s107 + $0x100] sm:$0xff] %v433
        %506 = vst [vmem:[%s107 + $0x108] sm:$0xff] %v434
        %507 = vst [vmem:[%s107 + $0x110] sm:$0xff] %v435
        %508 = vst [vmem:[%s107 + $0x118] sm:$0xff] %v436
        %509 = vst [vmem:[%s107 + $0x120] sm:$0xff] %v437
        %510 = vst [vmem:[%s107 + $0x128] sm:$0xff] %v438
        %511 = vst [vmem:[%s107 + $0x130] sm:$0xff] %v439
        %512 = vst [vmem:[%s107 + $0x138] sm:$0xff] %v440
        %513 = vst [vmem:[%s107 + $0x140] sm:$0xff] %v441
        %514 = vst [vmem:[%s107 + $0x148] sm:$0xff] %v442
        %515 = vst [vmem:[%s107 + $0x150] sm:$0xff] %v443
        %516 = vst [vmem:[%s107 + $0x158] sm:$0xff] %v444
        %517 = vst [vmem:[%s107 + $0x160] sm:$0xff] %v445
        %518 = vst [vmem:[%s107 + $0x168] sm:$0xff] %v446
        %519 = vst [vmem:[%s107 + $0x170] sm:$0xff] %v447
        %520 = vst [vmem:[%s107 + $0x178] sm:$0xff] %v448
        %521 = vst [vmem:[%s107 + $0x180] sm:$0xff] %v449
        %522 = vst [vmem:[%s107 + $0x188] sm:$0xff] %v450
        %523 = vst [vmem:[%s107 + $0x190] sm:$0xff] %v451
        %524 = vst [vmem:[%s107 + $0x198] sm:$0xff] %v452
        %525 = vst [vmem:[%s107 + $0x1a0] sm:$0xff] %v453
        %526 = vst [vmem:[%s107 + $0x1a8] sm:$0xff] %v454
        %527 = vst [vmem:[%s107 + $0x1b0] sm:$0xff] %v455
        %528 = vst [vmem:[%s107 + $0x1b8] sm:$0xff] %v456
        %529 = vst [vmem:[%s107 + $0x1c0] sm:$0xff] %v457
        %530 = vst [vmem:[%s107 + $0x1c8] sm:$0xff] %v458
        %531 = vst [vmem:[%s107 + $0x1d0] sm:$0xff] %v459
        %532 = vst [vmem:[%s107 + $0x1d8] sm:$0xff] %v460
        %533 = vst [vmem:[%s107 + $0x1e0] sm:$0xff] %v461
        %534 = vst [vmem:[%s107 + $0x1e8] sm:$0xff] %v462
        %535 = vst [vmem:[%s107 + $0x1f0] sm:$0xff] %v463
        %536 = vst [vmem:[%s107 + $0x1f8] sm:$0xff] %v464
        %537 = vst [vmem:[%s107 + $0x200] sm:$0xff] %v465
        %538 = vst [vmem:[%s107 + $0x208] sm:$0xff] %v466
        %539 = vst [vmem:[%s107 + $0x210] sm:$0xff] %v467
        %540 = vst [vmem:[%s107 + $0x218] sm:$0xff] %v468
        %541 = vst [vmem:[%s107 + $0x220] sm:$0xff] %v469
        %542 = vst [vmem:[%s107 + $0x228] sm:$0xff] %v470
        %543 = vst [vmem:[%s107 + $0x230] sm:$0xff] %v471
        %544 = vst [vmem:[%s107 + $0x238] sm:$0xff] %v472
        %s545 = sand.u32 %s45, 1
        %s546 = scalar_lea.sflag [#allocation4], %s545
        %s547 = sand.u32 %s45, 1
        %s548 = smul.addr %s547, 576
        %s549 = scalar_lea.vmem [#allocation5], %s548
        // Predicated region
        $region29: #{tpu_custom_call.1} parent=23 // pred_check
          %p550 = pneg %p55
        $region30: #{tpu_custom_call.1} parent=23 // pred_check_branch
          %552 = sbr.rel (%p550) target = $region32
        $region31: #{tpu_custom_call.1} parent=23 // pred_region
          %s553 = smul.u32 4, %s16
          %s555 = ssub.s32 9216, 9216
          %556 = vsyncadd %s546, %s555
          %s557 = smul.addr %s553, 18
          %s558 = smul.addr %s557, 128
          %s559 = scalar_lea.hbm %s1, %s558
          %s560 = sshll.u32 %s549, 4
          %s561 = int_to_ptr.vmem [resolvable:$true] %s560
          %566 = dma.vmem_to_hbm [thread:$0]  %s561, 9216, %s559, %s546, 2304, 2304, 144
        $region32: #{tpu_custom_call.1} parent=23 // pred_fallthru
          _
      $region24: #{tpu_custom_call.1} parent=5 // pred_fallthru
        _
      %p567 = scmp.le.s32.totalorder 2, %s11
      // Predicated region
      $region33: #{tpu_custom_call.1} parent=5 // pred_check
        %p568 = pneg %p567
      $region34: #{tpu_custom_call.1} parent=5 // pred_check_branch
        %570 = sbr.rel (%p568) target = $region36
      $region35: #{tpu_custom_call.1} parent=5 // pred_region
        %s571 = ssub.s32 %s11, 2
        // Predicated region
        $region37: #{tpu_custom_call.1} parent=35 // pred_check
          %p572 = pneg %p61
        $region38: #{tpu_custom_call.1} parent=35 // pred_check_branch
          %574 = sbr.rel (%p572) target = $region40
        $region39: #{tpu_custom_call.1} parent=35 // pred_region
          %s575 = sand.u32 %s46, 1
          %s576 = scalar_lea.sflag [#allocation4], %s575
          %s577 = sand.u32 %s46, 1
          %s578 = smul.addr %s577, 576
          %s579 = scalar_lea.vmem [#allocation5], %s578
          %580 = dma.done %s576, 9216
        $region40: #{tpu_custom_call.1} parent=35 // pred_fallthru
          _
      $region36: #{tpu_custom_call.1} parent=5 // pred_fallthru
        _
    $region6: #{tpu_custom_call.1} parent=1 // loop_footer
      %s15 = sadd.s32 1, %s11
    $region7: #{tpu_custom_call.1} parent=1 // loop_footer_branch
      %10 = sbr.rel target = $region3
    $region8: #{tpu_custom_call.1} parent=1 // loop_exit
      _
    %581 = vsyncpa [#allocation3], 1
    %s582 = scalar_lea.sflag [#allocation3], 1
    %583 = vsyncpa %s582, 1
    %584 = vsyncpa [#allocation4], 1
    %s585 = scalar_lea.sflag [#allocation4], 1
    %586 = vsyncpa %s585, 1

</llo_original>
